<compile_context>
chip_gen: v6e
topology: v6e:2x2x1
jax: 0.10.0
libtpu: 0.0.40
codegen_flags: <defaults>
</compile_context>

<pallas_src>
from functools import partial

import numpy as np
import jax
import jax.numpy as jnp
from jax.experimental import pallas as pl
from jax.experimental.pallas import tpu as pltpu

_VMEM_LIMIT = 48 * 1024 * 1024   # fits v7x's 64 MiB/TC with headroom; fine on v5e/v6e


def _replicated_spec(shape):
    """BlockSpec for a grid-invariant operand (weights / biases / LN params):
    constant index_map and single-buffering (the block never changes, so the
    default double buffer only wastes VMEM)."""
    nd = len(shape)
    idx = lambda *_args, _nd=nd: (0,) * _nd
    try:
        return pl.BlockSpec(shape, idx, pipeline_mode=pl.Buffered(1))
    except TypeError:   # older jax without pipeline_mode: fall back to default
        return pl.BlockSpec(shape, idx)


# ---------------------------------------------------------------------------
# Stage 1: K / V projections, computed once per position (not per query tile).
# ---------------------------------------------------------------------------
def _kv_proj_kernel(x_ref, wk_ref, bk_ref, wv_ref, bv_ref, k_ref, v_ref):
    xb = x_ref[0].astype(jnp.bfloat16)                                  # (TL, D)
    k = jnp.dot(xb, wk_ref[...], preferred_element_type=jnp.float32) + bk_ref[...]
    v = jnp.dot(xb, wv_ref[...], preferred_element_type=jnp.float32) + bv_ref[...]
    k_ref[0] = k.astype(k_ref.dtype)
    v_ref[0] = v.astype(v_ref.dtype)


def _project_kv(x, wk, bk, wv, bv, *, tl):
    N, L, D = x.shape
    return pl.pallas_call(
        _kv_proj_kernel,
        out_shape=(jax.ShapeDtypeStruct((N, L, D), jnp.bfloat16),
                   jax.ShapeDtypeStruct((N, L, D), jnp.bfloat16)),
        grid_spec=pltpu.PrefetchScalarGridSpec(
            num_scalar_prefetch=0,
            grid=(N, L // tl),
            in_specs=[pl.BlockSpec((1, tl, D), lambda n, i: (n, i, 0)),
                      _replicated_spec(wk.shape), _replicated_spec(bk.shape),
                      _replicated_spec(wv.shape), _replicated_spec(bv.shape)],
            out_specs=(pl.BlockSpec((1, tl, D), lambda n, i: (n, i, 0)),
                       pl.BlockSpec((1, tl, D), lambda n, i: (n, i, 0)))),
        compiler_params=pltpu.CompilerParams(
            dimension_semantics=("parallel", "parallel"),
            vmem_limit_bytes=_VMEM_LIMIT),
    )(x, wk, bk, wv, bv)


# ---------------------------------------------------------------------------
# Stage 2: attention + Add&LN + FFN + Add&LN, tiled over (batch, query tiles).
# ---------------------------------------------------------------------------
def encoder_layer_kernel(x_ref, k_ref, v_ref, bias_ref,
                         wq_ref, bq_ref, wo_ref, bo_ref,
                         g1_ref, be1_ref, w1_ref, b1_ref, w2_ref, b2_ref,
                         g2_ref, be2_ref,
                         o_ref, ctx_ref, *, num_heads, head_dim, eps):
    x_q = x_ref[0]                                    # (TQ, D) f32: query source + residual
    x_q_bf = x_q.astype(jnp.bfloat16)

    # Q projection: lane-dense (TQ, D) x (D, D) bf16 MXU matmul, f32 accumulate.
    scale = 1.0 / np.sqrt(head_dim)
    q = (jnp.dot(x_q_bf, wq_ref[...], preferred_element_type=jnp.float32)
         + bq_ref[...]) * scale                       # 1/sqrt(d_k) folded into q
    q = q.astype(jnp.bfloat16)

    k = k_ref[0]                                      # (L, D) bf16, precomputed in stage 1
    v = v_ref[0]                                      # (L, D) bf16
    bias = bias_ref[0].astype(jnp.float32)            # (TQ, L) additive mask (-1e4 where masked)

    # Per-head attention.  Each head's context is written at its lane offset in a
    # (TQ, D) bf16 VMEM scratch so the output projection is ONE lane-dense GEMM.
    # TODO(synk): for very long L, loop over K/V in tk-chunks with online softmax.
    dn_qk = (((1,), (1,)), ((), ()))                  # contract last dims: K^T folded into MXU feed
    for h in range(num_heads):                        # static, unrolled
        sl = slice(h * head_dim, (h + 1) * head_dim)
        s = jax.lax.dot_general(q[:, sl], k[:, sl], dn_qk,
                                preferred_element_type=jnp.float32) + bias
        s = s - jnp.max(s, axis=-1, keepdims=True)
        p = jnp.exp(s)
        p = p * pl.reciprocal(jnp.sum(p, axis=-1, keepdims=True), approx=True)
        ctx_ref[:, sl] = jnp.dot(p.astype(jnp.bfloat16), v[:, sl],
                                 preferred_element_type=jnp.float32
                                 ).astype(jnp.bfloat16)

    # Single (TQ, D) x (D, D) output projection (no per-head low-fill GEMMs).
    attn = jnp.dot(ctx_ref[...], wo_ref[...],
                   preferred_element_type=jnp.float32) + bo_ref[...]

    def layernorm(y, g, b):
        mu = jnp.mean(y, axis=-1, keepdims=True)
        var = jnp.mean(jnp.square(y - mu), axis=-1, keepdims=True)   # biased var (PyTorch LN)
        return (y - mu) * jax.lax.rsqrt(var + eps) * g + b

    y1 = layernorm(x_q + attn, g1_ref[...], be1_ref[...])            # norm1(residual + attention)

    # Position-wise FFN (Conv1d kernel-size 1 == per-position Linear), bf16 MXU / f32 acc.
    h1 = jnp.maximum(
        jnp.dot(y1.astype(jnp.bfloat16), w1_ref[...],
                preferred_element_type=jnp.float32) + b1_ref[...], 0.0)
    ffn = jnp.dot(h1.astype(jnp.bfloat16), w2_ref[...],
                  preferred_element_type=jnp.float32) + b2_ref[...]

    o_ref[0] = layernorm(y1 + ffn, g2_ref[...], be2_ref[...]).astype(o_ref.dtype)


def encoder_layer(x, mask, params, num_heads, *, tq=None):
    """x: (N, L, D) f32; mask: (N, L, L), nonzero where attention is masked out."""
    N, L, D = x.shape
    assert D % num_heads == 0
    hd = D // num_heads
    if tq is None:
        tq = min(L, 128)            # re-derived for v7x's 64 MiB/TC; fits v5e/v6e too
    assert L % tq == 0 and tq % 8 == 0

    f32, bf16 = jnp.float32, jnp.bfloat16
    # MXU operands cast to bf16 once on the host (halves weight DMA / VMEM).
    wq = params['wq'].astype(bf16)
    wk = params['wk'].astype(bf16)
    wv = params['wv'].astype(bf16)
    wo = params['wo'].astype(bf16)                    # kept UNSPLIT: single output GEMM
    w1 = params['w1'].astype(bf16)
    w2 = params['w2'].astype(bf16)
    bq, bk, bv, bo = [params[nm].astype(f32) for nm in ('bq', 'bk', 'bv', 'bo')]
    g1, be1, g2, be2 = [params[nm].astype(f32) for nm in ('g1', 'be1', 'g2', 'be2')]
    b1, b2 = params['b1'].astype(f32), params['b2'].astype(f32)

    # Additive attention-mask bias in bf16 (half the per-step DMA of an f32 mask).
    # TODO(synk): if the mask is key-padding-like, pass an (N, 1, L) row instead of O(L^2).
    bias = (mask.astype(f32) * (-10000.0)).astype(bf16)

    # Stage 1: K/V computed once per position, stored bf16.
    k_bf, v_bf = _project_kv(x, wk, bk, wv, bv, tl=tq)

    weights = [wq, bq, wo, bo, g1, be1, w1, b1, w2, b2, g2, be2]
    kernel = partial(encoder_layer_kernel, num_heads=num_heads, head_dim=hd, eps=1e-5)
    return pl.pallas_call(
        kernel,
        out_shape=jax.ShapeDtypeStruct((N, L, D), x.dtype),
        grid_spec=pltpu.PrefetchScalarGridSpec(
            num_scalar_prefetch=0,
            grid=(N, L // tq),      # qi innermost: K/V blocks (index (n,0,0)) re-DMA only on n change
            in_specs=[pl.BlockSpec((1, tq, D), lambda n, qi: (n, qi, 0)),   # x query/residual tile (f32)
                      pl.BlockSpec((1, L, D), lambda n, qi: (n, 0, 0)),     # K, whole seq (bf16)
                      pl.BlockSpec((1, L, D), lambda n, qi: (n, 0, 0)),     # V, whole seq (bf16)
                      pl.BlockSpec((1, tq, L), lambda n, qi: (n, qi, 0))]   # mask-bias tile (bf16)
                     + [_replicated_spec(w.shape) for w in weights],
            out_specs=pl.BlockSpec((1, tq, D), lambda n, qi: (n, qi, 0)),
            scratch_shapes=[pltpu.VMEM((tq, D), jnp.bfloat16)]),            # per-head ctx slab
        compiler_params=pltpu.CompilerParams(
            dimension_semantics=("parallel", "parallel"),   # batch x query-tiles (v7x: 2 TCs)
            vmem_limit_bytes=_VMEM_LIMIT),
    )(x, k_bf, v_bf, bias, *weights)


def reference(x, mask, params, num_heads):
    """Pure-JAX f32 reference mirroring the PyTorch forward (eval mode)."""
    N, L, D = x.shape
    hd = D // num_heads
    q = (x @ params['wq'] + params['bq']).reshape(N, L, num_heads, hd).transpose(0, 2, 1, 3)
    k = (x @ params['wk'] + params['bk']).reshape(N, L, num_heads, hd).transpose(0, 2, 1, 3)
    v = (x @ params['wv'] + params['bv']).reshape(N, L, num_heads, hd).transpose(0, 2, 1, 3)
    s = jnp.einsum('nhqd,nhkd->nhqk', q, k) / np.sqrt(hd)
    s = jnp.where(mask[:, None, :, :] > 0.5, -10000.0, s)
    p = jax.nn.softmax(s, axis=-1)
    ctx = jnp.einsum('nhqk,nhkd->nhqd', p, v).transpose(0, 2, 1, 3).reshape(N, L, D)
    ctx = ctx @ params['wo'] + params['bo']

    def ln(y, g, b):
        mu = jnp.mean(y, axis=-1, keepdims=True)
        var = jnp.mean((y - mu) ** 2, axis=-1, keepdims=True)
        return (y - mu) * jax.lax.rsqrt(var + 1e-5) * g + b

    y1 = ln(x + ctx, params['g1'], params['be1'])
    ffn = jnp.maximum(y1 @ params['w1'] + params['b1'], 0.0) @ params['w2'] + params['b2']
    return ln(y1 + ffn, params['g2'], params['be2'])


if __name__ == "__main__":
    # Small but lane-dense shapes (last dims multiples of 128), and L large enough
    # that the grid has multiple query tiles per batch element (pipelining exercised).
    N, L, D, H, DFF = 2, 256, 128, 4, 256
    hd = D // H

    key = jax.random.PRNGKey(0)
    ks = jax.random.split(key, 16)

    std_qk = np.sqrt(2.0 / (D + hd))
    std_v = np.sqrt(2.0 / (D + hd))
    params = {
        # projection weights stored (in, out) so the kernel does x @ W + b
        'wq': jax.random.normal(ks[0], (D, D), jnp.float32) * std_qk,
        'wk': jax.random.normal(ks[1], (D, D), jnp.float32) * std_qk,
        'wv': jax.random.normal(ks[2], (D, D), jnp.float32) * std_v,
        'wo': jax.random.normal(ks[3], (D, D), jnp.float32) * std_v,
        'bq': jax.random.normal(ks[4], (1, D), jnp.float32) * 0.02,
        'bk': jax.random.normal(ks[5], (1, D), jnp.float32) * 0.02,
        'bv': jax.random.normal(ks[6], (1, D), jnp.float32) * 0.02,
        'bo': jax.random.normal(ks[7], (1, D), jnp.float32) * 0.02,
        # LayerNorm affine params (PyTorch default: ones / zeros)
        'g1': jnp.ones((1, D), jnp.float32),
        'be1': jnp.zeros((1, D), jnp.float32),
        'g2': jnp.ones((1, D), jnp.float32),
        'be2': jnp.zeros((1, D), jnp.float32),
        # PosFFN (Conv1d k=1) weights, stored (in, out)
        'w1': jax.random.normal(ks[8], (D, DFF), jnp.float32) * np.sqrt(1.0 / D),
        'b1': jax.random.normal(ks[9], (1, DFF), jnp.float32) * 0.02,
        'w2': jax.random.normal(ks[10], (DFF, D), jnp.float32) * np.sqrt(1.0 / DFF),
        'b2': jax.random.normal(ks[11], (1, D), jnp.float32) * 0.02,
    }

    x = jax.random.normal(ks[12], (N, L, D), jnp.float32)
    # attn_mask: (N, q_len, k_len); 1.0 where masked (True in PyTorch masked_fill_).
    mask = (jax.random.uniform(ks[13], (N, L, L)) < 0.1).astype(jnp.float32)

    out = jax.block_until_ready(encoder_layer(x, mask, params, H))
    ref = reference(x, mask, params, H)

    # Kernel uses bf16 MXU operands (f32 accumulation) + EUP approx reciprocal +
    # bf16 mask bias, so tolerance vs. the pure-f32 reference reflects bf16 rounding.
    np.testing.assert_allclose(np.asarray(out, dtype=np.float32), np.asarray(ref),
                               rtol=1e-1, atol=1e-1)

    print("KERNEL_OK")
</pallas_src>

<mosaic_0001>
module attributes {stable_mosaic.version = 11 : i64} {
  func.func @_kv_proj_kernel(%arg0: i32, %arg1: i32, %arg2: memref<1x128x128xf32, #tpu.memory_space<vmem>>, %arg3: memref<128x128xbf16, #tpu.memory_space<vmem>>, %arg4: memref<1x128xf32, #tpu.memory_space<vmem>>, %arg5: memref<128x128xbf16, #tpu.memory_space<vmem>>, %arg6: memref<1x128xf32, #tpu.memory_space<vmem>>, %arg7: memref<1x128x128xbf16, #tpu.memory_space<vmem>>, %arg8: memref<1x128x128xbf16, #tpu.memory_space<vmem>>) attributes {dimension_semantics = [#tpu.dimension_semantics<parallel>, #tpu.dimension_semantics<parallel>], iteration_bounds = array<i64: 2, 2>, scalar_prefetch = 0 : i64, scratch_operands = 0 : i64, tpu.core_type = #tpu.core_type<tc>, window_params = [{transform_indices = @transform_0, window_bounds = array<i64: 1, 128, 128>}, {pipeline_mode = #tpu.pipeline_mode<synchronous>, transform_indices = @transform_1, window_bounds = array<i64: 128, 128>}, {pipeline_mode = #tpu.pipeline_mode<synchronous>, transform_indices = @transform_2, window_bounds = array<i64: 1, 128>}, {pipeline_mode = #tpu.pipeline_mode<synchronous>, transform_indices = @transform_3, window_bounds = array<i64: 128, 128>}, {pipeline_mode = #tpu.pipeline_mode<synchronous>, transform_indices = @transform_4, window_bounds = array<i64: 1, 128>}, {transform_indices = @transform_5, window_bounds = array<i64: 1, 128, 128>}, {transform_indices = @transform_6, window_bounds = array<i64: 1, 128, 128>}]} {
    %c0 = arith.constant 0 : index
    %c0_0 = arith.constant 0 : index
    %c0_1 = arith.constant 0 : index
    %0 = vector.load %arg2[%c0, %c0_0, %c0_1] : memref<1x128x128xf32, #tpu.memory_space<vmem>>, vector<1x128x128xf32>
    %1 = vector.shape_cast %0 : vector<1x128x128xf32> to vector<128x128xf32>
    %2 = arith.truncf %1 : vector<128x128xf32> to vector<128x128xbf16>
    %c0_2 = arith.constant 0 : index
    %c0_3 = arith.constant 0 : index
    %3 = vector.load %arg3[%c0_2, %c0_3] : memref<128x128xbf16, #tpu.memory_space<vmem>>, vector<128x128xbf16>
    %cst = arith.constant dense<0.000000e+00> : vector<128x128xf32>
    %4 = tpu.matmul %2, %3, %cst {dimension_numbers = #tpu.dot_dimension_numbers<[1], [0], [0], [1], [0, 0, 1, 1], [], []>} : vector<128x128xbf16>, vector<128x128xbf16>, vector<128x128xf32> -> vector<128x128xf32>
    %c0_4 = arith.constant 0 : index
    %c0_5 = arith.constant 0 : index
    %5 = vector.load %arg4[%c0_4, %c0_5] : memref<1x128xf32, #tpu.memory_space<vmem>>, vector<1x128xf32>
    %6 = vector.broadcast %5 : vector<1x128xf32> to vector<128x128xf32>
    %7 = arith.addf %4, %6 : vector<128x128xf32>
    %c0_6 = arith.constant 0 : index
    %c0_7 = arith.constant 0 : index
    %8 = vector.load %arg5[%c0_6, %c0_7] : memref<128x128xbf16, #tpu.memory_space<vmem>>, vector<128x128xbf16>
    %cst_8 = arith.constant dense<0.000000e+00> : vector<128x128xf32>
    %9 = tpu.matmul %2, %8, %cst_8 {dimension_numbers = #tpu.dot_dimension_numbers<[1], [0], [0], [1], [0, 0, 1, 1], [], []>} : vector<128x128xbf16>, vector<128x128xbf16>, vector<128x128xf32> -> vector<128x128xf32>
    %c0_9 = arith.constant 0 : index
    %c0_10 = arith.constant 0 : index
    %10 = vector.load %arg6[%c0_9, %c0_10] : memref<1x128xf32, #tpu.memory_space<vmem>>, vector<1x128xf32>
    %11 = vector.broadcast %10 : vector<1x128xf32> to vector<128x128xf32>
    %12 = arith.addf %9, %11 : vector<128x128xf32>
    %13 = arith.truncf %7 : vector<128x128xf32> to vector<128x128xbf16>
    %c0_11 = arith.constant 0 : index
    %c0_12 = arith.constant 0 : index
    %c0_13 = arith.constant 0 : index
    %14 = vector.load %arg7[%c0_11, %c0_12, %c0_13] : memref<1x128x128xbf16, #tpu.memory_space<vmem>>, vector<1x128x128xbf16>
    %15 = vector.shape_cast %14 : vector<1x128x128xbf16> to vector<128x128xbf16>
    %16 = vector.shape_cast %13 : vector<128x128xbf16> to vector<1x128x128xbf16>
    tpu.vector_store %arg7[%c0_11, %c0_12, %c0_13], %16 {strides = array<i32>} : memref<1x128x128xbf16, #tpu.memory_space<vmem>>, vector<1x128x128xbf16>,
    %17 = arith.truncf %12 : vector<128x128xf32> to vector<128x128xbf16>
    %c0_14 = arith.constant 0 : index
    %c0_15 = arith.constant 0 : index
    %c0_16 = arith.constant 0 : index
    %18 = vector.load %arg8[%c0_14, %c0_15, %c0_16] : memref<1x128x128xbf16, #tpu.memory_space<vmem>>, vector<1x128x128xbf16>
    %19 = vector.shape_cast %18 : vector<1x128x128xbf16> to vector<128x128xbf16>
    %20 = vector.shape_cast %17 : vector<128x128xbf16> to vector<1x128x128xbf16>
    tpu.vector_store %arg8[%c0_14, %c0_15, %c0_16], %20 {strides = array<i32>} : memref<1x128x128xbf16, #tpu.memory_space<vmem>>, vector<1x128x128xbf16>,
    return
  }
  func.func @transform_0(%arg0: i32, %arg1: i32) -> (i32, i32, i32) {
    %c0_i32 = arith.constant 0 : i32
    %c0_i32_0 = arith.constant 0 : i32
    return %arg0, %arg1, %c0_i32 : i32, i32, i32
  }
  func.func @transform_1(%arg0: i32, %arg1: i32) -> (i32, i32) {
    %c0_i32 = arith.constant 0 : i32
    %c0_i32_0 = arith.constant 0 : i32
    %c0_i32_1 = arith.constant 0 : i32
    return %c0_i32, %c0_i32_0 : i32, i32
  }
  func.func @transform_2(%arg0: i32, %arg1: i32) -> (i32, i32) {
    %c0_i32 = arith.constant 0 : i32
    %c0_i32_0 = arith.constant 0 : i32
    %c0_i32_1 = arith.constant 0 : i32
    return %c0_i32, %c0_i32_0 : i32, i32
  }
  func.func @transform_3(%arg0: i32, %arg1: i32) -> (i32, i32) {
    %c0_i32 = arith.constant 0 : i32
    %c0_i32_0 = arith.constant 0 : i32
    %c0_i32_1 = arith.constant 0 : i32
    return %c0_i32, %c0_i32_0 : i32, i32
  }
  func.func @transform_4(%arg0: i32, %arg1: i32) -> (i32, i32) {
    %c0_i32 = arith.constant 0 : i32
    %c0_i32_0 = arith.constant 0 : i32
    %c0_i32_1 = arith.constant 0 : i32
    return %c0_i32, %c0_i32_0 : i32, i32
  }
  func.func @transform_5(%arg0: i32, %arg1: i32) -> (i32, i32, i32) {
    %c0_i32 = arith.constant 0 : i32
    %c0_i32_0 = arith.constant 0 : i32
    return %arg0, %arg1, %c0_i32 : i32, i32, i32
  }
  func.func @transform_6(%arg0: i32, %arg1: i32) -> (i32, i32, i32) {
    %c0_i32 = arith.constant 0 : i32
    %c0_i32_0 = arith.constant 0 : i32
    return %arg0, %arg1, %c0_i32 : i32, i32, i32
  }
}

</mosaic_0001>

<llo_original>
// kernel: tpu_custom_call.1
$region0: #{tpu_custom_call.1}
  #allocation0 [shape = 'u32[]', space=smem, size = 0x4, offset = 0x4, fixed_abs, tag = 'smem constant byte address 0x4 - core index']
  #allocation1 [shape = 'u32[144,128]{1,0:T(1,128)}', space=vmem, size = 0x12000, scoped, tag = 'internal scratch']
  %s0 = inlined_call_operand.hbm [shape: f32[2,256,128], index: 0, kind: input, shape index: {}]
  %s1 = inlined_call_operand.hbm [shape: bf16[128,128], index: 1, kind: input, shape index: {}]
  %s2 = inlined_call_operand.vmem [shape: f32[1,128], index: 2, kind: input, shape index: {}]
  %s3 = inlined_call_operand.hbm [shape: bf16[128,128], index: 3, kind: input, shape index: {}]
  %s4 = inlined_call_operand.vmem [shape: f32[1,128], index: 4, kind: input, shape index: {}]
  %s5 = inlined_call_operand.hbm [shape: bf16[2,256,128], index: 5, kind: output, shape index: {0}]
  %s6 = inlined_call_operand.hbm [shape: bf16[2,256,128], index: 6, kind: output, shape index: {1}]
  %7 = xla_tuple %s5, %s6
  %s8 = sld [smem:[#allocation0]]
  $region73: #{tpu_custom_call.1} parent=0
    _
  %s10 = ssub.s32 1, %s8
  %s11 = scalar_select 0, %s10, %s8
  $region1: #{tpu_custom_call.1} parent=0
    #allocation2 [shape = 'u8[131072]{0}', space=vmem, size = 0x20000, scoped, tag = 'input window, operand 0']
    #allocation3 [shape = 's32[2]{0}', space=sflag, size = 0x8, scoped, tag = 'scoped memory for tpu_custom_call.1']
    #allocation4 [shape = 's32[2]{0}', space=sflag, size = 0x8, scoped, tag = 'scoped memory for tpu_custom_call.1']
    #allocation5 [shape = 'u8[32768]{0}', space=vmem, size = 0x8000, scoped, tag = 'input window, operand 1, single buffered']
    #allocation6 [shape = 's32[1]{0}', space=sflag, size = 0x4, scoped, tag = 'scoped memory for tpu_custom_call.1']
    #allocation7 [shape = 'u8[32768]{0}', space=vmem, size = 0x8000, scoped, tag = 'input window, operand 3, single buffered']
    #allocation8 [shape = 'u8[65536]{0}', space=vmem, size = 0x10000, scoped, tag = 'output window, operand 0']
    #allocation9 [shape = 'u8[65536]{0}', space=vmem, size = 0x10000, scoped, tag = 'output window, operand 1']
    #allocation10 [shape = 's32[2]{0}', space=sflag, size = 0x8, scoped, tag = 'scoped memory for tpu_custom_call.1']
    %12 = vsyncpa [#allocation3], 0
    %s13 = scalar_lea.sflag [#allocation3], 1
    %14 = vsyncpa %s13, 0
    %15 = vsyncpa [#allocation6], 0
    %16 = vsyncpa [#allocation4], 0
    %s17 = scalar_lea.sflag [#allocation4], 1
    %18 = vsyncpa %s17, 0
    %19 = vsyncpa [#allocation10], 0
    %s20 = scalar_lea.sflag [#allocation10], 1
    %21 = vsyncpa %s20, 0
    loop: start=0, step=1, limit=6
    $region2: #{tpu_custom_call.1} parent=1 // loop_pre_header
      _
    $region3: #{tpu_custom_call.1} parent=1 // loop_header
      %s23 = sphi 0, %s27
      %p24 = scmp.ge.s32.totalorder %s23, 6
      %s30 = sphi 0, %s42
      %s31 = sphi 0, %s38
      %s32 = sphi 0, %s30
      %s33 = sphi 0, %s31
      %s34 = sphi 0, %s32
      %s35 = sphi 0, %s33
      %s47 = sphi 0, %s49
      %s50 = sphi 0, %s47
      %s51 = sphi 0, %s50
      %s67 = sphi 0, %s51
      %s71 = sphi 0, %s71
      %s73 = sphi 0, %s71
      %s74 = sphi 0, %s73
      %s88 = sphi 0, %s74
      %s92 = sphi 0, %s92
      %s94 = sphi 0, %s92
      %s95 = sphi 0, %s94
      %s109 = sphi 0, %s95
      %s113 = sphi 0, %s113
      %s115 = sphi 0, %s113
      %s116 = sphi 0, %s115
      %s130 = sphi 0, %s116
      %s134 = sphi 0, %s134
      %s136 = sphi 0, %s134
      %s137 = sphi 0, %s136
      %s151 = sphi 0, %s137
      %s159 = sphi 0, %s161
      %s162 = sphi 0, %s159
      %s163 = sphi 0, %s162
      %s179 = sphi 0, %s163
      %s187 = sphi 0, %s189
      %s190 = sphi 0, %s187
      %s191 = sphi 0, %s190
      %s207 = sphi 0, %s191
    $region4: #{tpu_custom_call.1} parent=1 // loop_header_branch
      %26 = sbr.rel (%p24) target = $region8
    $region5: #{tpu_custom_call.1} parent=1 // loop_body
      %s28 = ssub.s32 %s23, 1
      %s29 = ssub.s32 %s23, 2
      %s36 = sadd.s32 1, %s31
      %p37 = scmp.ge.s32.totalorder %s36, 2
      %s38 = scalar_select %p37, 0, %s36
      %s39 = sadd.s32 1, %s30
      %s40 = scalar_select %p37, %s39, %s30
      %p41 = scmp.ge.s32.totalorder %s40, 2
      %s42 = scalar_select %p41, 0, %s40
      %s43 = ssub.s32 %s30, %s42
      %s44 = ssub.s32 %s31, %s38
      %s45 = sor.u32 %s43, %s44
      %p46 = scmp.eq.s32.totalorder %s45, 0
      %s48 = sadd.s32 %s47, 1
      %s49 = scalar_select %p46, %s47, %s48
      %p52 = pneg %p46
      %p53 = scmp.eq.s32.totalorder %s23, 3
      %p54 = por %p52, %p53
      %p55 = scmp.ne.s32.totalorder %s47, %s50
      %p56 = scmp.eq.s32.totalorder %s23, 0
      %p57 = por %p55, %p56
      %p58 = scmp.ne.s32.totalorder %s47, %s50
      %p59 = scmp.eq.s32.totalorder %s28, 3
      %p60 = por %p58, %p59
      %p61 = scmp.ne.s32.totalorder %s50, %s51
      %p62 = scmp.eq.s32.totalorder %s28, 0
      %p63 = por %p61, %p62
      %p64 = scmp.ne.s32.totalorder %s50, %s51
      %p65 = scmp.eq.s32.totalorder %s29, 3
      %p66 = por %p64, %p65
      %p68 = scmp.ne.s32.totalorder %s51, %s67
      %p69 = scmp.eq.s32.totalorder %s29, 0
      %p70 = por %p68, %p69
      %s72 = sadd.s32 %s71, 1
      %p75 = scmp.eq.s32.totalorder %s23, 3
      %p76 = scmp.ne.s32.totalorder %s71, %s73
      %p77 = scmp.eq.s32.totalorder %s23, 0
      %p78 = por %p76, %p77
      %p79 = scmp.ne.s32.totalorder %s71, %s73
      %p80 = scmp.eq.s32.totalorder %s28, 3
      %p81 = por %p79, %p80
      %p82 = scmp.ne.s32.totalorder %s73, %s74
      %p83 = scmp.eq.s32.totalorder %s28, 0
      %p84 = por %p82, %p83
      %p85 = scmp.ne.s32.totalorder %s73, %s74
      %p86 = scmp.eq.s32.totalorder %s29, 3
      %p87 = por %p85, %p86
      %p89 = scmp.ne.s32.totalorder %s74, %s88
      %p90 = scmp.eq.s32.totalorder %s29, 0
      %p91 = por %p89, %p90
      %s93 = sadd.s32 %s92, 1
      %p96 = scmp.eq.s32.totalorder %s23, 3
      %p97 = scmp.ne.s32.totalorder %s92, %s94
      %p98 = scmp.eq.s32.totalorder %s23, 0
      %p99 = por %p97, %p98
      %p100 = scmp.ne.s32.totalorder %s92, %s94
      %p101 = scmp.eq.s32.totalorder %s28, 3
      %p102 = por %p100, %p101
      %p103 = scmp.ne.s32.totalorder %s94, %s95
      %p104 = scmp.eq.s32.totalorder %s28, 0
      %p105 = por %p103, %p104
      %p106 = scmp.ne.s32.totalorder %s94, %s95
      %p107 = scmp.eq.s32.totalorder %s29, 3
      %p108 = por %p106, %p107
      %p110 = scmp.ne.s32.totalorder %s95, %s109
      %p111 = scmp.eq.s32.totalorder %s29, 0
      %p112 = por %p110, %p111
      %s114 = sadd.s32 %s113, 1
      %p117 = scmp.eq.s32.totalorder %s23, 3
      %p118 = scmp.ne.s32.totalorder %s113, %s115
      %p119 = scmp.eq.s32.totalorder %s23, 0
      %p120 = por %p118, %p119
      %p121 = scmp.ne.s32.totalorder %s113, %s115
      %p122 = scmp.eq.s32.totalorder %s28, 3
      %p123 = por %p121, %p122
      %p124 = scmp.ne.s32.totalorder %s115, %s116
      %p125 = scmp.eq.s32.totalorder %s28, 0
      %p126 = por %p124, %p125
      %p127 = scmp.ne.s32.totalorder %s115, %s116
      %p128 = scmp.eq.s32.totalorder %s29, 3
      %p129 = por %p127, %p128
      %p131 = scmp.ne.s32.totalorder %s116, %s130
      %p132 = scmp.eq.s32.totalorder %s29, 0
      %p133 = por %p131, %p132
      %s135 = sadd.s32 %s134, 1
      %p138 = scmp.eq.s32.totalorder %s23, 3
      %p139 = scmp.ne.s32.totalorder %s134, %s136
      %p140 = scmp.eq.s32.totalorder %s23, 0
      %p141 = por %p139, %p140
      %p142 = scmp.ne.s32.totalorder %s134, %s136
      %p143 = scmp.eq.s32.totalorder %s28, 3
      %p144 = por %p142, %p143
      %p145 = scmp.ne.s32.totalorder %s136, %s137
      %p146 = scmp.eq.s32.totalorder %s28, 0
      %p147 = por %p145, %p146
      %p148 = scmp.ne.s32.totalorder %s136, %s137
      %p149 = scmp.eq.s32.totalorder %s29, 3
      %p150 = por %p148, %p149
      %p152 = scmp.ne.s32.totalorder %s137, %s151
      %p153 = scmp.eq.s32.totalorder %s29, 0
      %p154 = por %p152, %p153
      %s155 = ssub.s32 %s30, %s42
      %s156 = ssub.s32 %s31, %s38
      %s157 = sor.u32 %s155, %s156
      %p158 = scmp.eq.s32.totalorder %s157, 0
      %s160 = sadd.s32 %s159, 1
      %s161 = scalar_select %p158, %s159, %s160
      %p164 = pneg %p158
      %p165 = scmp.eq.s32.totalorder %s23, 3
      %p166 = por %p164, %p165
      %p167 = scmp.ne.s32.totalorder %s159, %s162
      %p168 = scmp.eq.s32.totalorder %s23, 0
      %p169 = por %p167, %p168
      %p170 = scmp.ne.s32.totalorder %s159, %s162
      %p171 = scmp.eq.s32.totalorder %s28, 3
      %p172 = por %p170, %p171
      %p173 = scmp.ne.s32.totalorder %s162, %s163
      %p174 = scmp.eq.s32.totalorder %s28, 0
      %p175 = por %p173, %p174
      %p176 = scmp.ne.s32.totalorder %s162, %s163
      %p177 = scmp.eq.s32.totalorder %s29, 3
      %p178 = por %p176, %p177
      %p180 = scmp.ne.s32.totalorder %s163, %s179
      %p181 = scmp.eq.s32.totalorder %s29, 0
      %p182 = por %p180, %p181
      %s183 = ssub.s32 %s30, %s42
      %s184 = ssub.s32 %s31, %s38
      %s185 = sor.u32 %s183, %s184
      %p186 = scmp.eq.s32.totalorder %s185, 0
      %s188 = sadd.s32 %s187, 1
      %s189 = scalar_select %p186, %s187, %s188
      %p192 = pneg %p186
      %p193 = scmp.eq.s32.totalorder %s23, 3
      %p194 = por %p192, %p193
      %p195 = scmp.ne.s32.totalorder %s187, %s190
      %p196 = scmp.eq.s32.totalorder %s23, 0
      %p197 = por %p195, %p196
      %p198 = scmp.ne.s32.totalorder %s187, %s190
      %p199 = scmp.eq.s32.totalorder %s28, 3
      %p200 = por %p198, %p199
      %p201 = scmp.ne.s32.totalorder %s190, %s191
      %p202 = scmp.eq.s32.totalorder %s28, 0
      %p203 = por %p201, %p202
      %p204 = scmp.ne.s32.totalorder %s190, %s191
      %p205 = scmp.eq.s32.totalorder %s29, 3
      %p206 = por %p204, %p205
      %p208 = scmp.ne.s32.totalorder %s191, %s207
      %p209 = scmp.eq.s32.totalorder %s29, 0
      %p210 = por %p208, %p209
      %p211 = scmp.le.s32.totalorder 1, %s23
      %p212 = scmp.lt.s32.totalorder %s23, 5
      %p213 = pnand %p211, %p212
      %p214 = pneg %p213
      // Predicated region
      $region9: #{tpu_custom_call.1} parent=5 // pred_check
        _
      $region10: #{tpu_custom_call.1} parent=5 // pred_check_branch
        %216 = sbr.rel (%p213) target = $region12
      $region11: #{tpu_custom_call.1} parent=5 // pred_region
        %s217 = ssub.s32 %s23, 1
        // Predicated region
        $region13: #{tpu_custom_call.1} parent=11 // pred_check
          %p218 = pneg %p84
        $region14: #{tpu_custom_call.1} parent=11 // pred_check_branch
          %220 = sbr.rel (%p218) target = $region16
        $region15: #{tpu_custom_call.1} parent=11 // pred_region
          %s222 = ssub.s32 1024, 1024
          %223 = vsyncadd [#allocation6], %s222
          %s224 = sshll.u32 [#allocation5], 4
          %s225 = int_to_ptr.vmem [resolvable:$true] %s224
          %230 = dma.hbm_to_vmem [thread:$0]  %s1, 1024, %s225, [#allocation6], 64, 64, 4
        $region16: #{tpu_custom_call.1} parent=11 // pred_fallthru
          _
        // Predicated region
        $region17: #{tpu_custom_call.1} parent=11 // pred_check
          %p231 = pneg %p105
        $region18: #{tpu_custom_call.1} parent=11 // pred_check_branch
          %233 = sbr.rel (%p231) target = $region20
        $region19: #{tpu_custom_call.1} parent=11 // pred_region
          _
        $region20: #{tpu_custom_call.1} parent=11 // pred_fallthru
          _
        // Predicated region
        $region21: #{tpu_custom_call.1} parent=11 // pred_check
          %p234 = pneg %p126
        $region22: #{tpu_custom_call.1} parent=11 // pred_check_branch
          %236 = sbr.rel (%p234) target = $region24
        $region23: #{tpu_custom_call.1} parent=11 // pred_region
          %s238 = ssub.s32 1024, 1024
          %239 = vsyncadd [#allocation6], %s238
          %s240 = sshll.u32 [#allocation7], 4
          %s241 = int_to_ptr.vmem [resolvable:$true] %s240
          %246 = dma.hbm_to_vmem [thread:$0]  %s3, 1024, %s241, [#allocation6], 64, 64, 4
        $region24: #{tpu_custom_call.1} parent=11 // pred_fallthru
          _
        // Predicated region
        $region25: #{tpu_custom_call.1} parent=11 // pred_check
          %p247 = pneg %p147
        $region26: #{tpu_custom_call.1} parent=11 // pred_check_branch
          %249 = sbr.rel (%p247) target = $region28
        $region27: #{tpu_custom_call.1} parent=11 // pred_region
          _
        $region28: #{tpu_custom_call.1} parent=11 // pred_fallthru
          _
      $region12: #{tpu_custom_call.1} parent=5 // pred_fallthru
        _
      %p250 = scmp.lt.s32.totalorder %s23, 4
      // Predicated region
      $region29: #{tpu_custom_call.1} parent=5 // pred_check
        %p251 = pneg %p250
      $region30: #{tpu_custom_call.1} parent=5 // pred_check_branch
        %253 = sbr.rel (%p251) target = $region32
      $region31: #{tpu_custom_call.1} parent=5 // pred_region
        // Predicated region
        $region33: #{tpu_custom_call.1} parent=31 // pred_check
          %p254 = pneg %p57
        $region34: #{tpu_custom_call.1} parent=31 // pred_check_branch
          %256 = sbr.rel (%p254) target = $region36
        $region35: #{tpu_custom_call.1} parent=31 // pred_region
          %s257 = sand.u32 %s47, 1
          %s258 = scalar_lea.sflag [#allocation3], %s257
          %s259 = sand.u32 %s47, 1
          %s260 = smul.addr %s259, 128
          %s261 = scalar_lea.vmem [#allocation2], %s260
          %s262 = smul.u32 16, %s31
          %s264 = ssub.s32 2048, 2048
          %265 = vsyncadd %s258, %s264
          %s266 = smul.addr %s30, 32
          %s267 = sadd.s32 %s262, %s266
          %s268 = smul.addr %s267, 128
          %s269 = scalar_lea.hbm %s0, %s268
          %s270 = sshll.u32 %s261, 4
          %s271 = int_to_ptr.vmem [resolvable:$true] %s270
          %276 = dma.hbm_to_vmem [thread:$0]  %s269, 2048, %s271, %s258, 128, 128, 8
        $region36: #{tpu_custom_call.1} parent=31 // pred_fallthru
          _
      $region32: #{tpu_custom_call.1} parent=5 // pred_fallthru
        _
      %p277 = scmp.le.s32.totalorder 1, %s23
      %p278 = scmp.lt.s32.totalorder %s23, 5
      %p279 = pnand %p277, %p278
      %p280 = pneg %p279
      // Predicated region
      $region37: #{tpu_custom_call.1} parent=5 // pred_check
        _
      $region38: #{tpu_custom_call.1} parent=5 // pred_check_branch
        %282 = sbr.rel (%p279) target = $region40
      $region39: #{tpu_custom_call.1} parent=5 // pred_region
        %s283 = ssub.s32 %s23, 1
        %s284 = sand.u32 %s50, 1
        %s285 = scalar_lea.sflag [#allocation3], %s284
        %s286 = sand.u32 %s50, 1
        %s287 = smul.addr %s286, 128
        %s288 = scalar_lea.vmem [#allocation2], %s287
        // Predicated region
        $region41: #{tpu_custom_call.1} parent=39 // pred_check
          %p289 = pneg %p63
        $region42: #{tpu_custom_call.1} parent=39 // pred_check_branch
          %291 = sbr.rel (%p289) target = $region44
        $region43: #{tpu_custom_call.1} parent=39 // pred_region
          %292 = dma.done %s285, 2048
        $region44: #{tpu_custom_call.1} parent=39 // pred_fallthru
          _
        // Predicated region
        $region45: #{tpu_custom_call.1} parent=39 // pred_check
          %p293 = pneg %p84
        $region46: #{tpu_custom_call.1} parent=39 // pred_check_branch
          %295 = sbr.rel (%p293) target = $region48
        $region47: #{tpu_custom_call.1} parent=39 // pred_region
          %296 = dma.done [#allocation6], 1024
        $region48: #{tpu_custom_call.1} parent=39 // pred_fallthru
          _
        // Predicated region
        $region49: #{tpu_custom_call.1} parent=39 // pred_check
          %p297 = pneg %p126
        $region50: #{tpu_custom_call.1} parent=39 // pred_check_branch
          %299 = sbr.rel (%p297) target = $region52
        $region51: #{tpu_custom_call.1} parent=39 // pred_region
          %300 = dma.done [#allocation6], 1024
        $region52: #{tpu_custom_call.1} parent=39 // pred_fallthru
          _
        %s301 = sand.u32 %s50, 1
        %s302 = scalar_lea.sflag [#allocation3], %s301
        %s303 = sand.u32 %s50, 1
        %s304 = smul.addr %s303, 128
        %s305 = scalar_lea.vmem [#allocation2], %s304
        %p306 = pneg %p63
        %p307 = pneg %p60
        %p308 = pneg %p84
        %p309 = pneg %p81
        %p310 = pneg %p105
        %p311 = pneg %p102
        %p312 = pneg %p126
        %p313 = pneg %p123
        %p314 = pneg %p147
        %p315 = pneg %p144
        %p316 = pneg %p175
        %p317 = pneg %p172
        %s318 = sand.u32 %s162, 1
        %s319 = scalar_lea.sflag [#allocation4], %s318
        %s320 = sand.u32 %s162, 1
        %s321 = smul.addr %s320, 64
        %s322 = scalar_lea.vmem [#allocation8], %s321
        %p323 = pneg %p203
        %p324 = pneg %p200
        %s325 = sand.u32 %s190, 1
        %s326 = scalar_lea.sflag [#allocation10], %s325
        %s327 = sand.u32 %s190, 1
        %s328 = smul.addr %s327, 64
        %s329 = scalar_lea.vmem [#allocation9], %s328
        %s330 = smul.u32 16, %s33
        %s331 = smul.u32 16, %s33
        %s332 = smul.u32 16, %s33
        %v334 = vld [vmem:[%s288] sm:$0xff]
        %v335 = vld [vmem:[%s288 + $0x8] sm:$0xff]
        %v336 = vld [vmem:[%s288 + $0x10] sm:$0xff]
        %v337 = vld [vmem:[%s288 + $0x18] sm:$0xff]
        %v338 = vld [vmem:[%s288 + $0x20] sm:$0xff]
        %v339 = vld [vmem:[%s288 + $0x28] sm:$0xff]
        %v340 = vld [vmem:[%s288 + $0x30] sm:$0xff]
        %v341 = vld [vmem:[%s288 + $0x38] sm:$0xff]
        %v342 = vld [vmem:[%s288 + $0x40] sm:$0xff]
        %v343 = vld [vmem:[%s288 + $0x48] sm:$0xff]
        %v344 = vld [vmem:[%s288 + $0x50] sm:$0xff]
        %v345 = vld [vmem:[%s288 + $0x58] sm:$0xff]
        %v346 = vld [vmem:[%s288 + $0x60] sm:$0xff]
        %v347 = vld [vmem:[%s288 + $0x68] sm:$0xff]
        %v348 = vld [vmem:[%s288 + $0x70] sm:$0xff]
        %v349 = vld [vmem:[%s288 + $0x78] sm:$0xff]
        %v350 = vpack.c.bf16 %v335, %v334
        %v351 = vpack.c.bf16 %v337, %v336
        %v352 = vpack.c.bf16 %v339, %v338
        %v353 = vpack.c.bf16 %v341, %v340
        %v354 = vpack.c.bf16 %v343, %v342
        %v355 = vpack.c.bf16 %v345, %v344
        %v356 = vpack.c.bf16 %v347, %v346
        %v357 = vpack.c.bf16 %v349, %v348
        %v358 = vld [vmem:[#allocation5] sm:$0xf]
        %v359 = vld [vmem:[#allocation5 + $0x4] sm:$0xf]
        %v360 = vld [vmem:[#allocation5 + $0x8] sm:$0xf]
        %v361 = vld [vmem:[#allocation5 + $0xc] sm:$0xf]
        %v362 = vld [vmem:[#allocation5 + $0x10] sm:$0xf]
        %v363 = vld [vmem:[#allocation5 + $0x14] sm:$0xf]
        %v364 = vld [vmem:[#allocation5 + $0x18] sm:$0xf]
        %v365 = vld [vmem:[#allocation5 + $0x1c] sm:$0xf]
        %v366 = vld [vmem:[#allocation5 + $0x20] sm:$0xf]
        %v367 = vld [vmem:[#allocation5 + $0x24] sm:$0xf]
        %v368 = vld [vmem:[#allocation5 + $0x28] sm:$0xf]
        %v369 = vld [vmem:[#allocation5 + $0x2c] sm:$0xf]
        %v370 = vld [vmem:[#allocation5 + $0x30] sm:$0xf]
        %v371 = vld [vmem:[#allocation5 + $0x34] sm:$0xf]
        %v372 = vld [vmem:[#allocation5 + $0x38] sm:$0xf]
        %v373 = vld [vmem:[#allocation5 + $0x3c] sm:$0xf]
        %v374 = vld [vmem:[%s2] sm:$0x1]
        %v376 = vlaneseq
        %v377 = vshrl.u32 %v376, 7
        %v378 = vsub.s32 0, %v377
        %v379 = vrot.slane %v374, %v378
        %v397 = vunpack.c.l.b16 %v358
        %v398 = vunpack.c.l.b16 %v359
        %v399 = vunpack.c.l.b16 %v360
        %v400 = vunpack.c.l.b16 %v361
        %v401 = vunpack.c.l.b16 %v362
        %v402 = vunpack.c.l.b16 %v363
        %v403 = vunpack.c.l.b16 %v364
        %v404 = vunpack.c.l.b16 %v365
        %v405 = vunpack.c.l.b16 %v366
        %v406 = vunpack.c.l.b16 %v367
        %v407 = vunpack.c.l.b16 %v368
        %v408 = vunpack.c.l.b16 %v369
        %v409 = vunpack.c.l.b16 %v370
        %v410 = vunpack.c.l.b16 %v371
        %v411 = vunpack.c.l.b16 %v372
        %v412 = vunpack.c.l.b16 %v373
        %v413 = vpack.c.b16 %v398, %v397
        %v414 = vpack.c.b16 %v400, %v399
        %v415 = vpack.c.b16 %v402, %v401
        %v416 = vpack.c.b16 %v404, %v403
        %v417 = vpack.c.b16 %v406, %v405
        %v418 = vpack.c.b16 %v408, %v407
        %v419 = vpack.c.b16 %v410, %v409
        %v420 = vpack.c.b16 %v412, %v411
        %429 = vmatprep.subr.bf16.mxu0 0
        %430 = vmatpush1.bf16.msra.mxu0 %v420
        %431 = vmatprep.subr.bf16.mxu0 0
        %432 = vmatpush1.bf16.msra.mxu0 %v419
        %433 = vmatprep.subr.bf16.mxu0 0
        %434 = vmatpush1.bf16.msra.mxu0 %v418
        %435 = vmatprep.subr.bf16.mxu0 0
        %436 = vmatpush1.bf16.msra.mxu0 %v417
        %437 = vmatprep.subr.bf16.mxu0 0
        %438 = vmatpush1.bf16.msra.mxu0 %v416
        %439 = vmatprep.subr.bf16.mxu0 0
        %440 = vmatpush1.bf16.msra.mxu0 %v415
        %441 = vmatprep.subr.bf16.mxu0 0
        %442 = vmatpush1.bf16.msra.mxu0 %v414
        %443 = vmatprep.subr.bf16.mxu0 0
        %444 = vmatpush1.bf16.msra.mxu0 %v413
        %445 = vmatprep.subr.bf16.mxu0 0
        %446 = vmatpush2.bf16.msra.mxu0 0
        %447 = vmatprep.subr.bf16.mxu0 0
        %448 = vmatpush2.bf16.msra.mxu0 0
        %449 = vmatprep.subr.bf16.mxu0 0
        %450 = vmatpush2.bf16.msra.mxu0 0
        %451 = vmatprep.subr.bf16.mxu0 0
        %452 = vmatpush2.bf16.msra.mxu0 0
        %453 = vmatprep.subr.bf16.mxu0 0
        %454 = vmatpush2.bf16.msra.mxu0 0
        %455 = vmatprep.subr.bf16.mxu0 0
        %456 = vmatpush2.bf16.msra.mxu0 0
        %457 = vmatprep.subr.bf16.mxu0 0
        %458 = vmatpush2.bf16.msra.mxu0 0
        %459 = vmatprep.subr.bf16.mxu0 0
        %460 = vmatpush2.bf16.msra.mxu0 0
        %461 = vmatprep.mubr.bf16.mxu0 0
        %462 = vmatmul.mubr.bf16.gmra.mxu0 %v350
        %v463 = vpop.f32.mrf.mxu0
        %v464 = vadd.f32 %v379, %v463
        %v465 = vpop.f32.mrf.mxu0
        %v466 = vpop.f32.mrf.mxu0
        %v467 = vadd.f32 %v379, %v466
        %v468 = vpop.f32.mrf.mxu0
        %469 = vmatprep.mubr.bf16.mxu0 0
        %470 = vmatmul.mubr.bf16.gmra.mxu0 %v351
        %v471 = vpop.f32.mrf.mxu0
        %v472 = vadd.f32 %v379, %v471
        %v473 = vpop.f32.mrf.mxu0
        %v474 = vpop.f32.mrf.mxu0
        %v475 = vadd.f32 %v379, %v474
        %v476 = vpop.f32.mrf.mxu0
        %477 = vmatprep.mubr.bf16.mxu0 0
        %478 = vmatmul.mubr.bf16.gmra.mxu0 %v352
        %v479 = vpop.f32.mrf.mxu0
        %v480 = vadd.f32 %v379, %v479
        %v481 = vpop.f32.mrf.mxu0
        %v482 = vpop.f32.mrf.mxu0
        %v483 = vadd.f32 %v379, %v482
        %v484 = vpop.f32.mrf.mxu0
        %485 = vmatprep.mubr.bf16.mxu0 0
        %486 = vmatmul.mubr.bf16.gmra.mxu0 %v353
        %v487 = vpop.f32.mrf.mxu0
        %v488 = vadd.f32 %v379, %v487
        %v489 = vpop.f32.mrf.mxu0
        %v490 = vpop.f32.mrf.mxu0
        %v491 = vadd.f32 %v379, %v490
        %v492 = vpop.f32.mrf.mxu0
        %493 = vmatprep.mubr.bf16.mxu0 0
        %494 = vmatmul.mubr.bf16.gmra.mxu0 %v354
        %v495 = vpop.f32.mrf.mxu0
        %v496 = vadd.f32 %v379, %v495
        %v497 = vpop.f32.mrf.mxu0
        %v498 = vpop.f32.mrf.mxu0
        %v499 = vadd.f32 %v379, %v498
        %v500 = vpop.f32.mrf.mxu0
        %501 = vmatprep.mubr.bf16.mxu0 0
        %502 = vmatmul.mubr.bf16.gmra.mxu0 %v355
        %v503 = vpop.f32.mrf.mxu0
        %v504 = vadd.f32 %v379, %v503
        %v505 = vpop.f32.mrf.mxu0
        %v506 = vpop.f32.mrf.mxu0
        %v507 = vadd.f32 %v379, %v506
        %v508 = vpop.f32.mrf.mxu0
        %509 = vmatprep.mubr.bf16.mxu0 0
        %510 = vmatmul.mubr.bf16.gmra.mxu0 %v356
        %v511 = vpop.f32.mrf.mxu0
        %v512 = vadd.f32 %v379, %v511
        %v513 = vpop.f32.mrf.mxu0
        %v514 = vpop.f32.mrf.mxu0
        %v515 = vadd.f32 %v379, %v514
        %v516 = vpop.f32.mrf.mxu0
        %517 = vmatprep.mubr.bf16.mxu0 0
        %518 = vmatmul.mubr.bf16.gmra.mxu0 %v357
        %v519 = vpop.f32.mrf.mxu0
        %v520 = vadd.f32 %v379, %v519
        %v521 = vpop.f32.mrf.mxu0
        %v522 = vpop.f32.mrf.mxu0
        %v523 = vadd.f32 %v379, %v522
        %v524 = vpop.f32.mrf.mxu0
        %525 = vdwg.mxu0
        %v526 = vld [vmem:[#allocation7] sm:$0xf]
        %v527 = vld [vmem:[#allocation7 + $0x4] sm:$0xf]
        %v528 = vld [vmem:[#allocation7 + $0x8] sm:$0xf]
        %v529 = vld [vmem:[#allocation7 + $0xc] sm:$0xf]
        %v530 = vld [vmem:[#allocation7 + $0x10] sm:$0xf]
        %v531 = vld [vmem:[#allocation7 + $0x14] sm:$0xf]
        %v532 = vld [vmem:[#allocation7 + $0x18] sm:$0xf]
        %v533 = vld [vmem:[#allocation7 + $0x1c] sm:$0xf]
        %v534 = vld [vmem:[#allocation7 + $0x20] sm:$0xf]
        %v535 = vld [vmem:[#allocation7 + $0x24] sm:$0xf]
        %v536 = vld [vmem:[#allocation7 + $0x28] sm:$0xf]
        %v537 = vld [vmem:[#allocation7 + $0x2c] sm:$0xf]
        %v538 = vld [vmem:[#allocation7 + $0x30] sm:$0xf]
        %v539 = vld [vmem:[#allocation7 + $0x34] sm:$0xf]
        %v540 = vld [vmem:[#allocation7 + $0x38] sm:$0xf]
        %v541 = vld [vmem:[#allocation7 + $0x3c] sm:$0xf]
        %v542 = vld [vmem:[%s4] sm:$0x1]
        %v544 = vlaneseq
        %v545 = vshrl.u32 %v544, 7
        %v546 = vsub.s32 0, %v545
        %v547 = vrot.slane %v542, %v546
        %v565 = vunpack.c.l.b16 %v526
        %v566 = vunpack.c.l.b16 %v527
        %v567 = vunpack.c.l.b16 %v528
        %v568 = vunpack.c.l.b16 %v529
        %v569 = vunpack.c.l.b16 %v530
        %v570 = vunpack.c.l.b16 %v531
        %v571 = vunpack.c.l.b16 %v532
        %v572 = vunpack.c.l.b16 %v533
        %v573 = vunpack.c.l.b16 %v534
        %v574 = vunpack.c.l.b16 %v535
        %v575 = vunpack.c.l.b16 %v536
        %v576 = vunpack.c.l.b16 %v537
        %v577 = vunpack.c.l.b16 %v538
        %v578 = vunpack.c.l.b16 %v539
        %v579 = vunpack.c.l.b16 %v540
        %v580 = vunpack.c.l.b16 %v541
        %v581 = vpack.c.b16 %v566, %v565
        %v582 = vpack.c.b16 %v568, %v567
        %v583 = vpack.c.b16 %v570, %v569
        %v584 = vpack.c.b16 %v572, %v571
        %v585 = vpack.c.b16 %v574, %v573
        %v586 = vpack.c.b16 %v576, %v575
        %v587 = vpack.c.b16 %v578, %v577
        %v588 = vpack.c.b16 %v580, %v579
        %597 = vmatprep.subr.bf16.mxu0 0
        %598 = vmatpush1.bf16.msra.mxu0 %v588
        %599 = vmatprep.subr.bf16.mxu0 0
        %600 = vmatpush1.bf16.msra.mxu0 %v587
        %601 = vmatprep.subr.bf16.mxu0 0
        %602 = vmatpush1.bf16.msra.mxu0 %v586
        %603 = vmatprep.subr.bf16.mxu0 0
        %604 = vmatpush1.bf16.msra.mxu0 %v585
        %605 = vmatprep.subr.bf16.mxu0 0
        %606 = vmatpush1.bf16.msra.mxu0 %v584
        %607 = vmatprep.subr.bf16.mxu0 0
        %608 = vmatpush1.bf16.msra.mxu0 %v583
        %609 = vmatprep.subr.bf16.mxu0 0
        %610 = vmatpush1.bf16.msra.mxu0 %v582
        %611 = vmatprep.subr.bf16.mxu0 0
        %612 = vmatpush1.bf16.msra.mxu0 %v581
        %613 = vmatprep.subr.bf16.mxu0 0
        %614 = vmatpush2.bf16.msra.mxu0 0
        %615 = vmatprep.subr.bf16.mxu0 0
        %616 = vmatpush2.bf16.msra.mxu0 0
        %617 = vmatprep.subr.bf16.mxu0 0
        %618 = vmatpush2.bf16.msra.mxu0 0
        %619 = vmatprep.subr.bf16.mxu0 0
        %620 = vmatpush2.bf16.msra.mxu0 0
        %621 = vmatprep.subr.bf16.mxu0 0
        %622 = vmatpush2.bf16.msra.mxu0 0
        %623 = vmatprep.subr.bf16.mxu0 0
        %624 = vmatpush2.bf16.msra.mxu0 0
        %625 = vmatprep.subr.bf16.mxu0 0
        %626 = vmatpush2.bf16.msra.mxu0 0
        %627 = vmatprep.subr.bf16.mxu0 0
        %628 = vmatpush2.bf16.msra.mxu0 0
        %629 = vmatprep.mubr.bf16.mxu0 0
        %630 = vmatmul.mubr.bf16.gmra.mxu0 %v350
        %v631 = vpop.f32.mrf.mxu0
        %v632 = vadd.f32 %v547, %v631
        %v633 = vpop.f32.mrf.mxu0
        %v634 = vpop.f32.mrf.mxu0
        %v635 = vadd.f32 %v547, %v634
        %v636 = vpop.f32.mrf.mxu0
        %637 = vmatprep.mubr.bf16.mxu0 0
        %638 = vmatmul.mubr.bf16.gmra.mxu0 %v351
        %v639 = vpop.f32.mrf.mxu0
        %v640 = vadd.f32 %v547, %v639
        %v641 = vpop.f32.mrf.mxu0
        %v642 = vpop.f32.mrf.mxu0
        %v643 = vadd.f32 %v547, %v642
        %v644 = vpop.f32.mrf.mxu0
        %645 = vmatprep.mubr.bf16.mxu0 0
        %646 = vmatmul.mubr.bf16.gmra.mxu0 %v352
        %v647 = vpop.f32.mrf.mxu0
        %v648 = vadd.f32 %v547, %v647
        %v649 = vpop.f32.mrf.mxu0
        %v650 = vpop.f32.mrf.mxu0
        %v651 = vadd.f32 %v547, %v650
        %v652 = vpop.f32.mrf.mxu0
        %653 = vmatprep.mubr.bf16.mxu0 0
        %654 = vmatmul.mubr.bf16.gmra.mxu0 %v353
        %v655 = vpop.f32.mrf.mxu0
        %v656 = vadd.f32 %v547, %v655
        %v657 = vpop.f32.mrf.mxu0
        %v658 = vpop.f32.mrf.mxu0
        %v659 = vadd.f32 %v547, %v658
        %v660 = vpop.f32.mrf.mxu0
        %661 = vmatprep.mubr.bf16.mxu0 0
        %662 = vmatmul.mubr.bf16.gmra.mxu0 %v354
        %v663 = vpop.f32.mrf.mxu0
        %v664 = vadd.f32 %v547, %v663
        %v665 = vpop.f32.mrf.mxu0
        %v666 = vpop.f32.mrf.mxu0
        %v667 = vadd.f32 %v547, %v666
        %v668 = vpop.f32.mrf.mxu0
        %669 = vmatprep.mubr.bf16.mxu0 0
        %670 = vmatmul.mubr.bf16.gmra.mxu0 %v355
        %v671 = vpop.f32.mrf.mxu0
        %v672 = vadd.f32 %v547, %v671
        %v673 = vpop.f32.mrf.mxu0
        %v674 = vpop.f32.mrf.mxu0
        %v675 = vadd.f32 %v547, %v674
        %v676 = vpop.f32.mrf.mxu0
        %677 = vmatprep.mubr.bf16.mxu0 0
        %678 = vmatmul.mubr.bf16.gmra.mxu0 %v356
        %v679 = vpop.f32.mrf.mxu0
        %v680 = vadd.f32 %v547, %v679
        %v681 = vpop.f32.mrf.mxu0
        %v682 = vpop.f32.mrf.mxu0
        %v683 = vadd.f32 %v547, %v682
        %v684 = vpop.f32.mrf.mxu0
        %685 = vmatprep.mubr.bf16.mxu0 0
        %686 = vmatmul.mubr.bf16.gmra.mxu0 %v357
        %v687 = vpop.f32.mrf.mxu0
        %v688 = vadd.f32 %v547, %v687
        %v689 = vpop.f32.mrf.mxu0
        %v690 = vpop.f32.mrf.mxu0
        %v691 = vadd.f32 %v547, %v690
        %v692 = vpop.f32.mrf.mxu0
        %693 = vdwg.mxu0
        %v694 = vpack.c.bf16 %v467, %v464
        %v695 = vpack.c.bf16 %v475, %v472
        %v696 = vpack.c.bf16 %v483, %v480
        %v697 = vpack.c.bf16 %v491, %v488
        %v698 = vpack.c.bf16 %v499, %v496
        %v699 = vpack.c.bf16 %v507, %v504
        %v700 = vpack.c.bf16 %v515, %v512
        %v701 = vpack.c.bf16 %v523, %v520
        %v710 = vunpack.c.l.b16 %v694
        %v711 = vunpack.c.h.b16 %v694
        %v712 = vunpack.c.l.b16 %v695
        %v713 = vunpack.c.h.b16 %v695
        %v714 = vunpack.c.l.b16 %v696
        %v715 = vunpack.c.h.b16 %v696
        %v716 = vunpack.c.l.b16 %v697
        %v717 = vunpack.c.h.b16 %v697
        %v718 = vunpack.c.l.b16 %v698
        %v719 = vunpack.c.h.b16 %v698
        %v720 = vunpack.c.l.b16 %v699
        %v721 = vunpack.c.h.b16 %v699
        %v722 = vunpack.c.l.b16 %v700
        %v723 = vunpack.c.h.b16 %v700
        %v724 = vunpack.c.l.b16 %v701
        %v725 = vunpack.c.h.b16 %v701
        %v726 = vpack.c.b16 %v710, %v710
        %v727 = vpack.c.b16 %v711, %v711
        %v728 = vpack.c.b16 %v712, %v712
        %v729 = vpack.c.b16 %v713, %v713
        %v730 = vpack.c.b16 %v714, %v714
        %v731 = vpack.c.b16 %v715, %v715
        %v732 = vpack.c.b16 %v716, %v716
        %v733 = vpack.c.b16 %v717, %v717
        %v734 = vpack.c.b16 %v718, %v718
        %v735 = vpack.c.b16 %v719, %v719
        %v736 = vpack.c.b16 %v720, %v720
        %v737 = vpack.c.b16 %v721, %v721
        %v738 = vpack.c.b16 %v722, %v722
        %v739 = vpack.c.b16 %v723, %v723
        %v740 = vpack.c.b16 %v724, %v724
        %v741 = vpack.c.b16 %v725, %v725
        %758 = vst [vmem:[%s322] sm:$0xf] %v726
        %759 = vst [vmem:[%s322 + $0x4] sm:$0xf] %v727
        %760 = vst [vmem:[%s322 + $0x8] sm:$0xf] %v728
        %761 = vst [vmem:[%s322 + $0xc] sm:$0xf] %v729
        %762 = vst [vmem:[%s322 + $0x10] sm:$0xf] %v730
        %763 = vst [vmem:[%s322 + $0x14] sm:$0xf] %v731
        %764 = vst [vmem:[%s322 + $0x18] sm:$0xf] %v732
        %765 = vst [vmem:[%s322 + $0x1c] sm:$0xf] %v733
        %766 = vst [vmem:[%s322 + $0x20] sm:$0xf] %v734
        %767 = vst [vmem:[%s322 + $0x24] sm:$0xf] %v735
        %768 = vst [vmem:[%s322 + $0x28] sm:$0xf] %v736
        %769 = vst [vmem:[%s322 + $0x2c] sm:$0xf] %v737
        %770 = vst [vmem:[%s322 + $0x30] sm:$0xf] %v738
        %771 = vst [vmem:[%s322 + $0x34] sm:$0xf] %v739
        %772 = vst [vmem:[%s322 + $0x38] sm:$0xf] %v740
        %773 = vst [vmem:[%s322 + $0x3c] sm:$0xf] %v741
        %v774 = vpack.c.bf16 %v635, %v632
        %v775 = vpack.c.bf16 %v643, %v640
        %v776 = vpack.c.bf16 %v651, %v648
        %v777 = vpack.c.bf16 %v659, %v656
        %v778 = vpack.c.bf16 %v667, %v664
        %v779 = vpack.c.bf16 %v675, %v672
        %v780 = vpack.c.bf16 %v683, %v680
        %v781 = vpack.c.bf16 %v691, %v688
        %v790 = vunpack.c.l.b16 %v774
        %v791 = vunpack.c.h.b16 %v774
        %v792 = vunpack.c.l.b16 %v775
        %v793 = vunpack.c.h.b16 %v775
        %v794 = vunpack.c.l.b16 %v776
        %v795 = vunpack.c.h.b16 %v776
        %v796 = vunpack.c.l.b16 %v777
        %v797 = vunpack.c.h.b16 %v777
        %v798 = vunpack.c.l.b16 %v778
        %v799 = vunpack.c.h.b16 %v778
        %v800 = vunpack.c.l.b16 %v779
        %v801 = vunpack.c.h.b16 %v779
        %v802 = vunpack.c.l.b16 %v780
        %v803 = vunpack.c.h.b16 %v780
        %v804 = vunpack.c.l.b16 %v781
        %v805 = vunpack.c.h.b16 %v781
        %v806 = vpack.c.b16 %v790, %v790
        %v807 = vpack.c.b16 %v791, %v791
        %v808 = vpack.c.b16 %v792, %v792
        %v809 = vpack.c.b16 %v793, %v793
        %v810 = vpack.c.b16 %v794, %v794
        %v811 = vpack.c.b16 %v795, %v795
        %v812 = vpack.c.b16 %v796, %v796
        %v813 = vpack.c.b16 %v797, %v797
        %v814 = vpack.c.b16 %v798, %v798
        %v815 = vpack.c.b16 %v799, %v799
        %v816 = vpack.c.b16 %v800, %v800
        %v817 = vpack.c.b16 %v801, %v801
        %v818 = vpack.c.b16 %v802, %v802
        %v819 = vpack.c.b16 %v803, %v803
        %v820 = vpack.c.b16 %v804, %v804
        %v821 = vpack.c.b16 %v805, %v805
        %838 = vst [vmem:[%s329] sm:$0xf] %v806
        %839 = vst [vmem:[%s329 + $0x4] sm:$0xf] %v807
        %840 = vst [vmem:[%s329 + $0x8] sm:$0xf] %v808
        %841 = vst [vmem:[%s329 + $0xc] sm:$0xf] %v809
        %842 = vst [vmem:[%s329 + $0x10] sm:$0xf] %v810
        %843 = vst [vmem:[%s329 + $0x14] sm:$0xf] %v811
        %844 = vst [vmem:[%s329 + $0x18] sm:$0xf] %v812
        %845 = vst [vmem:[%s329 + $0x1c] sm:$0xf] %v813
        %846 = vst [vmem:[%s329 + $0x20] sm:$0xf] %v814
        %847 = vst [vmem:[%s329 + $0x24] sm:$0xf] %v815
        %848 = vst [vmem:[%s329 + $0x28] sm:$0xf] %v816
        %849 = vst [vmem:[%s329 + $0x2c] sm:$0xf] %v817
        %850 = vst [vmem:[%s329 + $0x30] sm:$0xf] %v818
        %851 = vst [vmem:[%s329 + $0x34] sm:$0xf] %v819
        %852 = vst [vmem:[%s329 + $0x38] sm:$0xf] %v820
        %853 = vst [vmem:[%s329 + $0x3c] sm:$0xf] %v821
        %s854 = sand.u32 %s162, 1
        %s855 = scalar_lea.sflag [#allocation4], %s854
        %s856 = sand.u32 %s162, 1
        %s857 = smul.addr %s856, 64
        %s858 = scalar_lea.vmem [#allocation8], %s857
        %s859 = sand.u32 %s190, 1
        %s860 = scalar_lea.sflag [#allocation10], %s859
        %s861 = sand.u32 %s190, 1
        %s862 = smul.addr %s861, 64
        %s863 = scalar_lea.vmem [#allocation9], %s862
        // Predicated region
        $region53: #{tpu_custom_call.1} parent=39 // pred_check
          %p864 = pneg %p172
        $region54: #{tpu_custom_call.1} parent=39 // pred_check_branch
          %866 = sbr.rel (%p864) target = $region56
        $region55: #{tpu_custom_call.1} parent=39 // pred_region
          %s867 = smul.u32 16, %s33
          %s869 = ssub.s32 1024, 1024
          %870 = vsyncadd %s855, %s869
          %s871 = smul.addr %s32, 32
          %s872 = sadd.s32 %s867, %s871
          %s873 = smul.addr %s872, 64
          %s874 = scalar_lea.hbm %s5, %s873
          %s875 = sshll.u32 %s858, 4
          %s876 = int_to_ptr.vmem [resolvable:$true] %s875
          %881 = dma.vmem_to_hbm [thread:$0]  %s876, 1024, %s874, %s855, 64, 64, 4
        $region56: #{tpu_custom_call.1} parent=39 // pred_fallthru
          _
        // Predicated region
        $region57: #{tpu_custom_call.1} parent=39 // pred_check
          %p882 = pneg %p200
        $region58: #{tpu_custom_call.1} parent=39 // pred_check_branch
          %884 = sbr.rel (%p882) target = $region60
        $region59: #{tpu_custom_call.1} parent=39 // pred_region
          %s885 = smul.u32 16, %s33
          %s887 = ssub.s32 1024, 1024
          %888 = vsyncadd %s860, %s887
          %s889 = smul.addr %s32, 32
          %s890 = sadd.s32 %s885, %s889
          %s891 = smul.addr %s890, 64
          %s892 = scalar_lea.hbm %s6, %s891
          %s893 = sshll.u32 %s863, 4
          %s894 = int_to_ptr.vmem [resolvable:$true] %s893
          %899 = dma.vmem_to_hbm [thread:$0]  %s894, 1024, %s892, %s860, 64, 64, 4
        $region60: #{tpu_custom_call.1} parent=39 // pred_fallthru
          _
      $region40: #{tpu_custom_call.1} parent=5 // pred_fallthru
        _
      %p900 = scmp.le.s32.totalorder 2, %s23
      // Predicated region
      $region61: #{tpu_custom_call.1} parent=5 // pred_check
        %p901 = pneg %p900
      $region62: #{tpu_custom_call.1} parent=5 // pred_check_branch
        %903 = sbr.rel (%p901) target = $region64
      $region63: #{tpu_custom_call.1} parent=5 // pred_region
        %s904 = ssub.s32 %s23, 2
        // Predicated region
        $region65: #{tpu_custom_call.1} parent=63 // pred_check
          %p905 = pneg %p178
        $region66: #{tpu_custom_call.1} parent=63 // pred_check_branch
          %907 = sbr.rel (%p905) target = $region68
        $region67: #{tpu_custom_call.1} parent=63 // pred_region
          %s908 = sand.u32 %s163, 1
          %s909 = scalar_lea.sflag [#allocation4], %s908
          %s910 = sand.u32 %s163, 1
          %s911 = smul.addr %s910, 64
          %s912 = scalar_lea.vmem [#allocation8], %s911
          %913 = dma.done %s909, 1024
        $region68: #{tpu_custom_call.1} parent=63 // pred_fallthru
          _
        // Predicated region
        $region69: #{tpu_custom_call.1} parent=63 // pred_check
          %p914 = pneg %p206
        $region70: #{tpu_custom_call.1} parent=63 // pred_check_branch
          %916 = sbr.rel (%p914) target = $region72
        $region71: #{tpu_custom_call.1} parent=63 // pred_region
          %s917 = sand.u32 %s191, 1
          %s918 = scalar_lea.sflag [#allocation10], %s917
          %s919 = sand.u32 %s191, 1
          %s920 = smul.addr %s919, 64
          %s921 = scalar_lea.vmem [#allocation9], %s920
          %922 = dma.done %s918, 1024
        $region72: #{tpu_custom_call.1} parent=63 // pred_fallthru
          _
      $region64: #{tpu_custom_call.1} parent=5 // pred_fallthru
        _
    $region6: #{tpu_custom_call.1} parent=1 // loop_footer
      %s27 = sadd.s32 1, %s23
    $region7: #{tpu_custom_call.1} parent=1 // loop_footer_branch
      %22 = sbr.rel target = $region3
    $region8: #{tpu_custom_call.1} parent=1 // loop_exit
      _
    %923 = vsyncpa [#allocation3], 1
    %s924 = scalar_lea.sflag [#allocation3], 1
    %925 = vsyncpa %s924, 1
    %926 = vsyncpa [#allocation6], 1
    %927 = vsyncpa [#allocation4], 1
    %s928 = scalar_lea.sflag [#allocation4], 1
    %929 = vsyncpa %s928, 1
    %930 = vsyncpa [#allocation10], 1
    %s931 = scalar_lea.sflag [#allocation10], 1
    %932 = vsyncpa %s931, 1

</llo_original>
